<compile_context>
chip_gen: v7x
topology: tpu7x:2x2x1
jax: 0.10.0
libtpu: 0.0.40
codegen_flags: <defaults>
</compile_context>

<pallas_src>
import functools

import jax
import jax.numpy as jnp
from jax.experimental import pallas as pl
from jax.experimental.pallas import tpu as pltpu


def _fused_tconv_tanh_kernel(x_ref, w1_ref, b1_ref, w2_ref, b2_ref, o_ref, *,
                             bb, cin, cout, k1, k2, wd1, wd2,
                             hw1, hw2, lead2, tail2):
    """Both ConvTranspose2d+tanh layers for a block of `bb` images.

    x_ref  : (bb, cin, len1)     layer-1 zero-padded flat images, row pitch wd2
    w1_ref : (cout, k1*k1*cin)   gather-form layer-1 weights (2-D)
    b1_ref : (cout, 1)
    w2_ref : (cout, k2*k2*cout)  gather-form layer-2 weights (2-D)
    b2_ref : (cout, 1)
    o_ref  : (bb, cout, hw2)     lane-dense output (hw2 = h2*wd2)
    """
    f32 = jnp.float32

    # ---------------- layer 1: im2col + ONE (batched) matmul ----------------
    # The padded image has row pitch wd2, so tap (ty,tx) is a pure flat shift
    # s = ty*wd2 + tx; stacking the k1^2 shifted windows along the channel axis
    # gives the im2col matrix with contraction depth k1*k1*cin.
    padded1 = x_ref[...]                                          # (bb, cin, len1)
    col1 = jnp.concatenate(
        [padded1[:, :, ty * wd2 + tx: ty * wd2 + tx + hw1]
         for ty in range(k1) for tx in range(k1)],
        axis=1)                                                   # (bb, k1*k1*cin, hw1)
    w1b = jnp.broadcast_to(w1_ref[...][None], (bb, cout, k1 * k1 * cin))
    acc1 = jnp.einsum('bok,bkl->bol', w1b, col1,
                      preferred_element_type=f32)                 # (bb, cout, hw1)
    out1 = jnp.tanh(acc1 + b1_ref[...][None])                     # (bb, cout, hw1)

    # Columns wd1..wd2-1 of each row are over-computed filler (layer 1 was run
    # at layer 2's row pitch); zero them so they become layer 2's zero padding.
    lane = jax.lax.broadcasted_iota(jnp.int32, (1, hw1), 1)
    if (wd2 & (wd2 - 1)) == 0:
        col_in_row = lane & (wd2 - 1)
    else:
        col_in_row = lane % wd2
    out1 = jnp.where(col_in_row < wd1, out1, 0.0)                 # (bb, cout, hw1)

    # ---------------- layer 2: value-level padding + ONE matmul --------------
    # Intermediate never leaves VMEM; padding is a single lane-axis concat.
    padded2 = jnp.concatenate(
        [jnp.zeros((bb, cout, lead2), f32), out1,
         jnp.zeros((bb, cout, tail2), f32)], axis=-1)             # (bb, cout, len2)
    col2 = jnp.concatenate(
        [padded2[:, :, ty * wd2 + tx: ty * wd2 + tx + hw2]
         for ty in range(k2) for tx in range(k2)],
        axis=1)                                                   # (bb, k2*k2*cout, hw2)
    w2b = jnp.broadcast_to(w2_ref[...][None], (bb, cout, k2 * k2 * cout))
    acc2 = jnp.einsum('bok,bkl->bol', w2b, col2,
                      preferred_element_type=f32)                 # (bb, cout, hw2)
    o_ref[...] = jnp.tanh(acc2 + b2_ref[...][None])               # lane-dense store


def _pick_batch_block(n):
    """Largest divisor of n that is <= min(8, n // 2): amortizes per-step
    overhead over several images while keeping >= 2 parallel grid steps so
    v7x's two TensorCores both get work (v5e/v6e are indifferent)."""
    if n < 2:
        return 1
    cap = min(8, n // 2)
    for b in range(cap, 0, -1):
        if n % b == 0:
            return b
    return 1


def model_forward(x, params):
    """x: (N, 4, Hin, Win) f32 -> (N, 4, Hout2, Wout2) f32."""
    (w1, b1), (w2, b2) = params
    n, cin, hin, win = x.shape
    cout = w1.shape[1]
    k1, k2 = w1.shape[2], w2.shape[2]
    op1, op2 = 2, 13

    h1, wd1 = hin + k1 - 1 + op1, win + k1 - 1 + op1      # 16, 16
    h2, wd2 = h1 + k2 - 1 + op2, wd1 + k2 - 1 + op2       # 32, 32
    hw1 = h1 * wd2          # layer-1 output, already at layer-2 row pitch
    hw2 = h2 * wd2

    # Layer-1 zero-padded flat image (row pitch wd2), prepared once by XLA —
    # it is tiny (n*cin*len1 floats) and replaces all in-kernel row scatters.
    lead1 = (k1 - 1) * wd2 + (k1 - 1)
    len1 = (h1 + k1) * wd2
    xi = jnp.pad(x, ((0, 0), (0, 0), (0, 0), (0, wd2 - win))).reshape(
        n, cin, hin * wd2)
    xp = jnp.pad(xi, ((0, 0), (0, 0), (lead1, len1 - lead1 - hin * wd2)))

    lead2 = (k2 - 1) * wd2 + (k2 - 1)
    len2 = (h2 + k2) * wd2
    tail2 = len2 - lead2 - hw1

    # Gather-form weights, 2-D: wm[co, (ty*k+tx)*ci + c] = w[c, co, k-1-ty, k-1-tx]
    w1m = jnp.flip(w1, (2, 3)).transpose(1, 2, 3, 0).reshape(cout, k1 * k1 * cin)
    w2m = jnp.flip(w2, (2, 3)).transpose(1, 2, 3, 0).reshape(cout, k2 * k2 * cout)

    bb = _pick_batch_block(n)
    kern = functools.partial(
        _fused_tconv_tanh_kernel, bb=bb, cin=cin, cout=cout, k1=k1, k2=k2,
        wd1=wd1, wd2=wd2, hw1=hw1, hw2=hw2, lead2=lead2, tail2=tail2)

    out_flat = pl.pallas_call(
        kern,
        out_shape=jax.ShapeDtypeStruct((n, cout, hw2), jnp.float32),
        grid=(n // bb,),
        in_specs=[
            pl.BlockSpec((bb, cin, len1), lambda i: (i, 0, 0)),
            pl.BlockSpec((cout, k1 * k1 * cin), lambda i: (0, 0)),
            pl.BlockSpec((cout, 1), lambda i: (0, 0)),
            pl.BlockSpec((cout, k2 * k2 * cout), lambda i: (0, 0)),
            pl.BlockSpec((cout, 1), lambda i: (0, 0)),
        ],
        out_specs=pl.BlockSpec((bb, cout, hw2), lambda i: (i, 0, 0)),
        compiler_params=pltpu.CompilerParams(
            dimension_semantics=("parallel",)),
    )(xp, w1m, b1.reshape(cout, 1), w2m, b2.reshape(cout, 1))

    return out_flat.reshape(n, cout, h2, wd2)


def init_params(key):
    """Deterministic init mimicking PyTorch's uniform(-1/sqrt(fan), 1/sqrt(fan))."""
    k1, k2, k3, k4 = jax.random.split(key, 4)

    def uni(k, shape, fan):
        bound = 1.0 / (fan ** 0.5)
        return jax.random.uniform(k, shape, jnp.float32, -bound, bound)

    w1 = uni(k1, (4, 4, 3, 3), 4 * 3 * 3)
    b1 = uni(k2, (4,), 4 * 3 * 3)
    w2 = uni(k3, (4, 4, 4, 4), 4 * 4 * 4)
    b2 = uni(k4, (4,), 4 * 4 * 4)
    return (w1, b1), (w2, b2)


def _ref_tconv_tanh(x, w, b, op):
    """Pure-JAX scatter-formulation reference (independent of the kernel path)."""
    n, cin, hin, win = x.shape
    _, cout, k, _ = w.shape
    hout, wout = hin + k - 1 + op, win + k - 1 + op
    out = jnp.zeros((n, cout, hout, wout), jnp.float32)
    for ky in range(k):
        for kx in range(k):
            out = out.at[:, :, ky:ky + hin, kx:kx + win].add(
                jnp.einsum("nchw,cd->ndhw", x, w[:, :, ky, kx])
            )
    return jnp.tanh(out + b[None, :, None, None])


def _ref_forward(x, params):
    (w1, b1), (w2, b2) = params
    out = _ref_tconv_tanh(x, w1, b1, 2)
    return _ref_tconv_tanh(out, w2, b2, 13)


if __name__ == "__main__":
    key = jax.random.PRNGKey(0)
    kx, kp = jax.random.split(key)
    x = jax.random.normal(kx, (2, 4, 12, 12), jnp.float32)
    params = init_params(kp)

    out = jax.jit(model_forward)(x, params)
    out = jax.block_until_ready(out)
    assert out.shape == (2, 4, 32, 32), out.shape

    ref = _ref_forward(x, params)
    assert jnp.allclose(out, ref, atol=2e-5, rtol=1e-5), float(
        jnp.max(jnp.abs(out - ref))
    )
    print("KERNEL_OK")
</pallas_src>

<mosaic_0001>
module attributes {stable_mosaic.version = 11 : i64} {
  func.func @_fused_tconv_tanh_kernel(%arg0: i32, %arg1: memref<1x4x608xf32, #tpu.memory_space<vmem>>, %arg2: memref<4x36xf32, #tpu.memory_space<vmem>>, %arg3: memref<4x1xf32, #tpu.memory_space<vmem>>, %arg4: memref<4x64xf32, #tpu.memory_space<vmem>>, %arg5: memref<4x1xf32, #tpu.memory_space<vmem>>, %arg6: memref<1x4x1024xf32, #tpu.memory_space<vmem>>) attributes {dimension_semantics = [#tpu.dimension_semantics<parallel>], iteration_bounds = array<i64: 2>, scalar_prefetch = 0 : i64, scratch_operands = 0 : i64, tpu.core_type = #tpu.core_type<tc>, window_params = [{transform_indices = @transform_0, window_bounds = array<i64: 1, 4, 608>}, {pipeline_mode = #tpu.pipeline_mode<synchronous>, transform_indices = @transform_1, window_bounds = array<i64: 4, 36>}, {pipeline_mode = #tpu.pipeline_mode<synchronous>, transform_indices = @transform_2, window_bounds = array<i64: 4, 1>}, {pipeline_mode = #tpu.pipeline_mode<synchronous>, transform_indices = @transform_3, window_bounds = array<i64: 4, 64>}, {pipeline_mode = #tpu.pipeline_mode<synchronous>, transform_indices = @transform_4, window_bounds = array<i64: 4, 1>}, {transform_indices = @transform_5, window_bounds = array<i64: 1, 4, 1024>}]} {
    %c0 = arith.constant 0 : index
    %c0_0 = arith.constant 0 : index
    %c0_1 = arith.constant 0 : index
    %0 = vector.load %arg1[%c0, %c0_0, %c0_1] : memref<1x4x608xf32, #tpu.memory_space<vmem>>, vector<1x4x608xf32>
    %1 = vector.extract_strided_slice %0 {offsets = [0, 0, 0], sizes = [1, 4, 512], strides = [1, 1, 1]} : vector<1x4x608xf32> to vector<1x4x512xf32>
    %2 = vector.extract_strided_slice %0 {offsets = [0, 0, 1], sizes = [1, 4, 512], strides = [1, 1, 1]} : vector<1x4x608xf32> to vector<1x4x512xf32>
    %3 = vector.extract_strided_slice %0 {offsets = [0, 0, 2], sizes = [1, 4, 512], strides = [1, 1, 1]} : vector<1x4x608xf32> to vector<1x4x512xf32>
    %4 = vector.extract_strided_slice %0 {offsets = [0, 0, 32], sizes = [1, 4, 512], strides = [1, 1, 1]} : vector<1x4x608xf32> to vector<1x4x512xf32>
    %5 = vector.extract_strided_slice %0 {offsets = [0, 0, 33], sizes = [1, 4, 512], strides = [1, 1, 1]} : vector<1x4x608xf32> to vector<1x4x512xf32>
    %6 = vector.extract_strided_slice %0 {offsets = [0, 0, 34], sizes = [1, 4, 512], strides = [1, 1, 1]} : vector<1x4x608xf32> to vector<1x4x512xf32>
    %7 = vector.extract_strided_slice %0 {offsets = [0, 0, 64], sizes = [1, 4, 512], strides = [1, 1, 1]} : vector<1x4x608xf32> to vector<1x4x512xf32>
    %8 = vector.extract_strided_slice %0 {offsets = [0, 0, 65], sizes = [1, 4, 512], strides = [1, 1, 1]} : vector<1x4x608xf32> to vector<1x4x512xf32>
    %9 = vector.extract_strided_slice %0 {offsets = [0, 0, 66], sizes = [1, 4, 512], strides = [1, 1, 1]} : vector<1x4x608xf32> to vector<1x4x512xf32>
    %10 = tpu.concatenate %1, %2, %3, %4, %5, %6, %7, %8, %9 in 1 : vector<1x4x512xf32>, vector<1x4x512xf32>, vector<1x4x512xf32>, vector<1x4x512xf32>, vector<1x4x512xf32>, vector<1x4x512xf32>, vector<1x4x512xf32>, vector<1x4x512xf32>, vector<1x4x512xf32> -> vector<1x36x512xf32>
    %c0_2 = arith.constant 0 : index
    %c0_3 = arith.constant 0 : index
    %11 = vector.load %arg2[%c0_2, %c0_3] : memref<4x36xf32, #tpu.memory_space<vmem>>, vector<4x36xf32>
    %12 = vector.shape_cast %11 : vector<4x36xf32> to vector<1x4x36xf32>
    "tpu.trace_start"() <{level = 10 : i32, message = "bok,bkl->bol"}> : () -> ()
    %cst = arith.constant dense<0.000000e+00> : vector<1x4x512xf32>
    %13 = tpu.matmul %12, %10, %cst {dimension_numbers = #tpu.dot_dimension_numbers<[2], [1], [1], [2], [0, 0, 0, 1, 1, 2], [0], [0]>} : vector<1x4x36xf32>, vector<1x36x512xf32>, vector<1x4x512xf32> -> vector<1x4x512xf32>
    "tpu.trace_stop"() : () -> ()
    %c0_4 = arith.constant 0 : index
    %c0_5 = arith.constant 0 : index
    %14 = vector.load %arg3[%c0_4, %c0_5] : memref<4x1xf32, #tpu.memory_space<vmem>>, vector<4x1xf32>
    %15 = vector.shape_cast %14 : vector<4x1xf32> to vector<1x4x1xf32>
    %16 = vector.broadcast %15 : vector<1x4x1xf32> to vector<1x4x512xf32>
    %17 = arith.addf %13, %16 : vector<1x4x512xf32>
    %18 = math.tanh %17 : vector<1x4x512xf32>
    %19 = tpu.iota {dimensions = array<i32: 1>} : vector<1x512xi32>
    %c31_i32 = arith.constant 31 : i32
    %20 = vector.broadcast %c31_i32 : i32 to vector<1x512xi32>
    %21 = arith.andi %19, %20 : vector<1x512xi32>
    %c16_i32 = arith.constant 16 : i32
    %22 = vector.broadcast %c16_i32 : i32 to vector<1x512xi32>
    %23 = arith.cmpi slt, %21, %22 : vector<1x512xi32>
    %cst_6 = arith.constant 0.000000e+00 : f32
    %24 = vector.shape_cast %23 : vector<1x512xi1> to vector<1x1x512xi1>
    %25 = vector.broadcast %24 : vector<1x1x512xi1> to vector<1x4x512xi1>
    %26 = vector.broadcast %cst_6 : f32 to vector<1x4x512xf32>
    %27 = arith.select %25, %18, %26 : vector<1x4x512xi1>, vector<1x4x512xf32>
    %cst_7 = arith.constant 0.000000e+00 : f32
    %28 = vector.broadcast %cst_7 : f32 to vector<1x4x99xf32>
    %cst_8 = arith.constant 0.000000e+00 : f32
    %29 = vector.broadcast %cst_8 : f32 to vector<1x4x541xf32>
    %30 = tpu.concatenate %28, %27, %29 in 2 : vector<1x4x99xf32>, vector<1x4x512xf32>, vector<1x4x541xf32> -> vector<1x4x1152xf32>
    %31 = vector.extract_strided_slice %30 {offsets = [0, 0, 0], sizes = [1, 4, 1024], strides = [1, 1, 1]} : vector<1x4x1152xf32> to vector<1x4x1024xf32>
    %32 = vector.extract_strided_slice %30 {offsets = [0, 0, 1], sizes = [1, 4, 1024], strides = [1, 1, 1]} : vector<1x4x1152xf32> to vector<1x4x1024xf32>
    %33 = vector.extract_strided_slice %30 {offsets = [0, 0, 2], sizes = [1, 4, 1024], strides = [1, 1, 1]} : vector<1x4x1152xf32> to vector<1x4x1024xf32>
    %34 = vector.extract_strided_slice %30 {offsets = [0, 0, 3], sizes = [1, 4, 1024], strides = [1, 1, 1]} : vector<1x4x1152xf32> to vector<1x4x1024xf32>
    %35 = vector.extract_strided_slice %30 {offsets = [0, 0, 32], sizes = [1, 4, 1024], strides = [1, 1, 1]} : vector<1x4x1152xf32> to vector<1x4x1024xf32>
    %36 = vector.extract_strided_slice %30 {offsets = [0, 0, 33], sizes = [1, 4, 1024], strides = [1, 1, 1]} : vector<1x4x1152xf32> to vector<1x4x1024xf32>
    %37 = vector.extract_strided_slice %30 {offsets = [0, 0, 34], sizes = [1, 4, 1024], strides = [1, 1, 1]} : vector<1x4x1152xf32> to vector<1x4x1024xf32>
    %38 = vector.extract_strided_slice %30 {offsets = [0, 0, 35], sizes = [1, 4, 1024], strides = [1, 1, 1]} : vector<1x4x1152xf32> to vector<1x4x1024xf32>
    %39 = vector.extract_strided_slice %30 {offsets = [0, 0, 64], sizes = [1, 4, 1024], strides = [1, 1, 1]} : vector<1x4x1152xf32> to vector<1x4x1024xf32>
    %40 = vector.extract_strided_slice %30 {offsets = [0, 0, 65], sizes = [1, 4, 1024], strides = [1, 1, 1]} : vector<1x4x1152xf32> to vector<1x4x1024xf32>
    %41 = vector.extract_strided_slice %30 {offsets = [0, 0, 66], sizes = [1, 4, 1024], strides = [1, 1, 1]} : vector<1x4x1152xf32> to vector<1x4x1024xf32>
    %42 = vector.extract_strided_slice %30 {offsets = [0, 0, 67], sizes = [1, 4, 1024], strides = [1, 1, 1]} : vector<1x4x1152xf32> to vector<1x4x1024xf32>
    %43 = vector.extract_strided_slice %30 {offsets = [0, 0, 96], sizes = [1, 4, 1024], strides = [1, 1, 1]} : vector<1x4x1152xf32> to vector<1x4x1024xf32>
    %44 = vector.extract_strided_slice %30 {offsets = [0, 0, 97], sizes = [1, 4, 1024], strides = [1, 1, 1]} : vector<1x4x1152xf32> to vector<1x4x1024xf32>
    %45 = vector.extract_strided_slice %30 {offsets = [0, 0, 98], sizes = [1, 4, 1024], strides = [1, 1, 1]} : vector<1x4x1152xf32> to vector<1x4x1024xf32>
    %46 = vector.extract_strided_slice %30 {offsets = [0, 0, 99], sizes = [1, 4, 1024], strides = [1, 1, 1]} : vector<1x4x1152xf32> to vector<1x4x1024xf32>
    %47 = tpu.concatenate %31, %32, %33, %34, %35, %36, %37, %38, %39, %40, %41, %42, %43, %44, %45, %46 in 1 : vector<1x4x1024xf32>, vector<1x4x1024xf32>, vector<1x4x1024xf32>, vector<1x4x1024xf32>, vector<1x4x1024xf32>, vector<1x4x1024xf32>, vector<1x4x1024xf32>, vector<1x4x1024xf32>, vector<1x4x1024xf32>, vector<1x4x1024xf32>, vector<1x4x1024xf32>, vector<1x4x1024xf32>, vector<1x4x1024xf32>, vector<1x4x1024xf32>, vector<1x4x1024xf32>, vector<1x4x1024xf32> -> vector<1x64x1024xf32>
    %c0_9 = arith.constant 0 : index
    %c0_10 = arith.constant 0 : index
    %48 = vector.load %arg4[%c0_9, %c0_10] : memref<4x64xf32, #tpu.memory_space<vmem>>, vector<4x64xf32>
    %49 = vector.shape_cast %48 : vector<4x64xf32> to vector<1x4x64xf32>
    "tpu.trace_start"() <{level = 10 : i32, message = "bok,bkl->bol"}> : () -> ()
    %cst_11 = arith.constant dense<0.000000e+00> : vector<1x4x1024xf32>
    %50 = tpu.matmul %49, %47, %cst_11 {dimension_numbers = #tpu.dot_dimension_numbers<[2], [1], [1], [2], [0, 0, 0, 1, 1, 2], [0], [0]>} : vector<1x4x64xf32>, vector<1x64x1024xf32>, vector<1x4x1024xf32> -> vector<1x4x1024xf32>
    "tpu.trace_stop"() : () -> ()
    %c0_12 = arith.constant 0 : index
    %c0_13 = arith.constant 0 : index
    %51 = vector.load %arg5[%c0_12, %c0_13] : memref<4x1xf32, #tpu.memory_space<vmem>>, vector<4x1xf32>
    %52 = vector.shape_cast %51 : vector<4x1xf32> to vector<1x4x1xf32>
    %53 = vector.broadcast %52 : vector<1x4x1xf32> to vector<1x4x1024xf32>
    %54 = arith.addf %50, %53 : vector<1x4x1024xf32>
    %55 = math.tanh %54 : vector<1x4x1024xf32>
    %c0_14 = arith.constant 0 : index
    %c0_15 = arith.constant 0 : index
    %c0_16 = arith.constant 0 : index
    %56 = vector.load %arg6[%c0_14, %c0_15, %c0_16] : memref<1x4x1024xf32, #tpu.memory_space<vmem>>, vector<1x4x1024xf32>
    tpu.vector_store %arg6[%c0_14, %c0_15, %c0_16], %55 {strides = array<i32>} : memref<1x4x1024xf32, #tpu.memory_space<vmem>>, vector<1x4x1024xf32>,
    return
  }
  func.func @transform_0(%arg0: i32) -> (i32, i32, i32) {
    %c0_i32 = arith.constant 0 : i32
    %c0_i32_0 = arith.constant 0 : i32
    %c0_i32_1 = arith.constant 0 : i32
    return %arg0, %c0_i32, %c0_i32_0 : i32, i32, i32
  }
  func.func @transform_1(%arg0: i32) -> (i32, i32) {
    %c0_i32 = arith.constant 0 : i32
    %c0_i32_0 = arith.constant 0 : i32
    %c0_i32_1 = arith.constant 0 : i32
    return %c0_i32, %c0_i32_0 : i32, i32
  }
  func.func @transform_2(%arg0: i32) -> (i32, i32) {
    %c0_i32 = arith.constant 0 : i32
    %c0_i32_0 = arith.constant 0 : i32
    %c0_i32_1 = arith.constant 0 : i32
    return %c0_i32, %c0_i32_0 : i32, i32
  }
  func.func @transform_3(%arg0: i32) -> (i32, i32) {
    %c0_i32 = arith.constant 0 : i32
    %c0_i32_0 = arith.constant 0 : i32
    %c0_i32_1 = arith.constant 0 : i32
    return %c0_i32, %c0_i32_0 : i32, i32
  }
  func.func @transform_4(%arg0: i32) -> (i32, i32) {
    %c0_i32 = arith.constant 0 : i32
    %c0_i32_0 = arith.constant 0 : i32
    %c0_i32_1 = arith.constant 0 : i32
    return %c0_i32, %c0_i32_0 : i32, i32
  }
  func.func @transform_5(%arg0: i32) -> (i32, i32, i32) {
    %c0_i32 = arith.constant 0 : i32
    %c0_i32_0 = arith.constant 0 : i32
    %c0_i32_1 = arith.constant 0 : i32
    return %arg0, %c0_i32, %c0_i32_0 : i32, i32, i32
  }
}

</mosaic_0001>

<llo_original>
// kernel: model_forward.1
$region0: #{model_forward.1}
  #allocation0 [shape = 'u32[]', space=smem, size = 0x4, offset = 0x4, fixed_abs, tag = 'smem constant byte address 0x4 - core index']
  #allocation1 [shape = 'u32[144,128]{1,0:T(1,128)}', space=vmem, size = 0x12000, scoped, tag = 'internal scratch']
  %s0 = inlined_call_operand.vmem [shape: f32[2,4,608], index: 0, kind: input, shape index: {}]
  %s1 = inlined_call_operand.vmem [shape: f32[4,36], index: 1, kind: input, shape index: {}]
  %s2 = inlined_call_operand.vmem [shape: f32[4,1], index: 2, kind: input, shape index: {}]
  %s3 = inlined_call_operand.vmem [shape: f32[4,64], index: 3, kind: input, shape index: {}]
  %s4 = inlined_call_operand.vmem [shape: f32[4,1], index: 4, kind: input, shape index: {}]
  %s5 = inlined_call_operand.vmem [shape: f32[2,4,1024], index: 5, kind: output, shape index: {}]
  %s6 = sld [smem:[#allocation0]]
  $region53: #{model_forward.1} parent=0
    _
  %s8 = ssub.s32 1, %s6
  %s9 = scalar_select 0, %s8, %s6
  loop: start=0, step=1, limit=4
  $region2: #{model_forward.1} parent=0 // loop_pre_header
    _
  $region3: #{model_forward.1} parent=0 // loop_header
    %s11 = sphi 0, %s15
    %p12 = scmp.ge.s32.totalorder %s11, 4
    %s21 = sphi 0, %s23
    %s24 = sphi 0, %s21
    %s25 = sphi 0, %s24
    %s41 = sphi 0, %s25
    %s45 = sphi 0, %s45
    %s47 = sphi 0, %s45
    %s48 = sphi 0, %s47
    %s62 = sphi 0, %s48
    %s66 = sphi 0, %s66
    %s68 = sphi 0, %s66
    %s69 = sphi 0, %s68
    %s83 = sphi 0, %s69
    %s87 = sphi 0, %s87
    %s89 = sphi 0, %s87
    %s90 = sphi 0, %s89
    %s104 = sphi 0, %s90
    %s108 = sphi 0, %s108
    %s110 = sphi 0, %s108
    %s111 = sphi 0, %s110
    %s125 = sphi 0, %s111
    %s131 = sphi 0, %s133
    %s134 = sphi 0, %s131
    %s135 = sphi 0, %s134
    %s151 = sphi 0, %s135
  $region4: #{model_forward.1} parent=0 // loop_header_branch
    %14 = sbr.rel (%p12) target = $region8
  $region5: #{model_forward.1} parent=0 // loop_body
    %s16 = ssub.s32 %s11, 1
    %s17 = ssub.s32 %s11, 2
    %s18 = sadd.s32 %s11, 1
    %s19 = ssub.s32 %s11, %s18
    %p20 = scmp.eq.s32.totalorder %s19, 0
    %s22 = sadd.s32 %s21, 1
    %s23 = scalar_select %p20, %s21, %s22
    %p26 = pneg %p20
    %p27 = scmp.eq.s32.totalorder %s11, 1
    %p28 = por %p26, %p27
    %p29 = scmp.ne.s32.totalorder %s21, %s24
    %p30 = scmp.eq.s32.totalorder %s11, 0
    %p31 = por %p29, %p30
    %p32 = scmp.ne.s32.totalorder %s21, %s24
    %p33 = scmp.eq.s32.totalorder %s16, 1
    %p34 = por %p32, %p33
    %p35 = scmp.ne.s32.totalorder %s24, %s25
    %p36 = scmp.eq.s32.totalorder %s16, 0
    %p37 = por %p35, %p36
    %p38 = scmp.ne.s32.totalorder %s24, %s25
    %p39 = scmp.eq.s32.totalorder %s17, 1
    %p40 = por %p38, %p39
    %p42 = scmp.ne.s32.totalorder %s25, %s41
    %p43 = scmp.eq.s32.totalorder %s17, 0
    %p44 = por %p42, %p43
    %s46 = sadd.s32 %s45, 1
    %p49 = scmp.eq.s32.totalorder %s11, 1
    %p50 = scmp.ne.s32.totalorder %s45, %s47
    %p51 = scmp.eq.s32.totalorder %s11, 0
    %p52 = por %p50, %p51
    %p53 = scmp.ne.s32.totalorder %s45, %s47
    %p54 = scmp.eq.s32.totalorder %s16, 1
    %p55 = por %p53, %p54
    %p56 = scmp.ne.s32.totalorder %s47, %s48
    %p57 = scmp.eq.s32.totalorder %s16, 0
    %p58 = por %p56, %p57
    %p59 = scmp.ne.s32.totalorder %s47, %s48
    %p60 = scmp.eq.s32.totalorder %s17, 1
    %p61 = por %p59, %p60
    %p63 = scmp.ne.s32.totalorder %s48, %s62
    %p64 = scmp.eq.s32.totalorder %s17, 0
    %p65 = por %p63, %p64
    %s67 = sadd.s32 %s66, 1
    %p70 = scmp.eq.s32.totalorder %s11, 1
    %p71 = scmp.ne.s32.totalorder %s66, %s68
    %p72 = scmp.eq.s32.totalorder %s11, 0
    %p73 = por %p71, %p72
    %p74 = scmp.ne.s32.totalorder %s66, %s68
    %p75 = scmp.eq.s32.totalorder %s16, 1
    %p76 = por %p74, %p75
    %p77 = scmp.ne.s32.totalorder %s68, %s69
    %p78 = scmp.eq.s32.totalorder %s16, 0
    %p79 = por %p77, %p78
    %p80 = scmp.ne.s32.totalorder %s68, %s69
    %p81 = scmp.eq.s32.totalorder %s17, 1
    %p82 = por %p80, %p81
    %p84 = scmp.ne.s32.totalorder %s69, %s83
    %p85 = scmp.eq.s32.totalorder %s17, 0
    %p86 = por %p84, %p85
    %s88 = sadd.s32 %s87, 1
    %p91 = scmp.eq.s32.totalorder %s11, 1
    %p92 = scmp.ne.s32.totalorder %s87, %s89
    %p93 = scmp.eq.s32.totalorder %s11, 0
    %p94 = por %p92, %p93
    %p95 = scmp.ne.s32.totalorder %s87, %s89
    %p96 = scmp.eq.s32.totalorder %s16, 1
    %p97 = por %p95, %p96
    %p98 = scmp.ne.s32.totalorder %s89, %s90
    %p99 = scmp.eq.s32.totalorder %s16, 0
    %p100 = por %p98, %p99
    %p101 = scmp.ne.s32.totalorder %s89, %s90
    %p102 = scmp.eq.s32.totalorder %s17, 1
    %p103 = por %p101, %p102
    %p105 = scmp.ne.s32.totalorder %s90, %s104
    %p106 = scmp.eq.s32.totalorder %s17, 0
    %p107 = por %p105, %p106
    %s109 = sadd.s32 %s108, 1
    %p112 = scmp.eq.s32.totalorder %s11, 1
    %p113 = scmp.ne.s32.totalorder %s108, %s110
    %p114 = scmp.eq.s32.totalorder %s11, 0
    %p115 = por %p113, %p114
    %p116 = scmp.ne.s32.totalorder %s108, %s110
    %p117 = scmp.eq.s32.totalorder %s16, 1
    %p118 = por %p116, %p117
    %p119 = scmp.ne.s32.totalorder %s110, %s111
    %p120 = scmp.eq.s32.totalorder %s16, 0
    %p121 = por %p119, %p120
    %p122 = scmp.ne.s32.totalorder %s110, %s111
    %p123 = scmp.eq.s32.totalorder %s17, 1
    %p124 = por %p122, %p123
    %p126 = scmp.ne.s32.totalorder %s111, %s125
    %p127 = scmp.eq.s32.totalorder %s17, 0
    %p128 = por %p126, %p127
    %s129 = ssub.s32 %s11, %s18
    %p130 = scmp.eq.s32.totalorder %s129, 0
    %s132 = sadd.s32 %s131, 1
    %s133 = scalar_select %p130, %s131, %s132
    %p136 = pneg %p130
    %p137 = scmp.eq.s32.totalorder %s11, 1
    %p138 = por %p136, %p137
    %p139 = scmp.ne.s32.totalorder %s131, %s134
    %p140 = scmp.eq.s32.totalorder %s11, 0
    %p141 = por %p139, %p140
    %p142 = scmp.ne.s32.totalorder %s131, %s134
    %p143 = scmp.eq.s32.totalorder %s16, 1
    %p144 = por %p142, %p143
    %p145 = scmp.ne.s32.totalorder %s134, %s135
    %p146 = scmp.eq.s32.totalorder %s16, 0
    %p147 = por %p145, %p146
    %p148 = scmp.ne.s32.totalorder %s134, %s135
    %p149 = scmp.eq.s32.totalorder %s17, 1
    %p150 = por %p148, %p149
    %p152 = scmp.ne.s32.totalorder %s135, %s151
    %p153 = scmp.eq.s32.totalorder %s17, 0
    %p154 = por %p152, %p153
    %p155 = scmp.le.s32.totalorder 1, %s11
    %p156 = scmp.lt.s32.totalorder %s11, 3
    %p157 = pnand %p155, %p156
    %p158 = pneg %p157
    // Predicated region
    $region9: #{model_forward.1} parent=5 // pred_check
      _
    $region10: #{model_forward.1} parent=5 // pred_check_branch
      %160 = sbr.rel (%p157) target = $region12
    $region11: #{model_forward.1} parent=5 // pred_region
      %s161 = ssub.s32 %s11, 1
      // Predicated region
      $region13: #{model_forward.1} parent=11 // pred_check
        %p162 = pneg %p58
      $region14: #{model_forward.1} parent=11 // pred_check_branch
        %164 = sbr.rel (%p162) target = $region16
      $region15: #{model_forward.1} parent=11 // pred_region
        _
      $region16: #{model_forward.1} parent=11 // pred_fallthru
        _
      // Predicated region
      $region17: #{model_forward.1} parent=11 // pred_check
        %p165 = pneg %p79
      $region18: #{model_forward.1} parent=11 // pred_check_branch
        %167 = sbr.rel (%p165) target = $region20
      $region19: #{model_forward.1} parent=11 // pred_region
        _
      $region20: #{model_forward.1} parent=11 // pred_fallthru
        _
      // Predicated region
      $region21: #{model_forward.1} parent=11 // pred_check
        %p168 = pneg %p100
      $region22: #{model_forward.1} parent=11 // pred_check_branch
        %170 = sbr.rel (%p168) target = $region24
      $region23: #{model_forward.1} parent=11 // pred_region
        _
      $region24: #{model_forward.1} parent=11 // pred_fallthru
        _
      // Predicated region
      $region25: #{model_forward.1} parent=11 // pred_check
        %p171 = pneg %p121
      $region26: #{model_forward.1} parent=11 // pred_check_branch
        %173 = sbr.rel (%p171) target = $region28
      $region27: #{model_forward.1} parent=11 // pred_region
        _
      $region28: #{model_forward.1} parent=11 // pred_fallthru
        _
    $region12: #{model_forward.1} parent=5 // pred_fallthru
      _
    %p174 = scmp.lt.s32.totalorder %s11, 2
    // Predicated region
    $region29: #{model_forward.1} parent=5 // pred_check
      %p175 = pneg %p174
    $region30: #{model_forward.1} parent=5 // pred_check_branch
      %177 = sbr.rel (%p175) target = $region32
    $region31: #{model_forward.1} parent=5 // pred_region
      // Predicated region
      $region33: #{model_forward.1} parent=31 // pred_check
        %p178 = pneg %p31
      $region34: #{model_forward.1} parent=31 // pred_check_branch
        %180 = sbr.rel (%p178) target = $region36
      $region35: #{model_forward.1} parent=31 // pred_region
        %p181 = scmp.lt.s32.totalorder %s11, 1
        %s182 = scalar_select %p181, %s11, 1
        %s183 = smul.addr %s182, 5
        %s184 = smul.addr %s183, 4
        %s185 = scalar_lea.vmem %s0, %s184
      $region36: #{model_forward.1} parent=31 // pred_fallthru
        _
    $region32: #{model_forward.1} parent=5 // pred_fallthru
      _
    %p186 = scmp.le.s32.totalorder 1, %s11
    %p187 = scmp.lt.s32.totalorder %s11, 3
    %p188 = pnand %p186, %p187
    %p189 = pneg %p188
    // Predicated region
    $region37: #{model_forward.1} parent=5 // pred_check
      _
    $region38: #{model_forward.1} parent=5 // pred_check_branch
      %191 = sbr.rel (%p188) target = $region40
    $region39: #{model_forward.1} parent=5 // pred_region
      %s192 = ssub.s32 %s11, 1
      %p193 = scmp.lt.s32.totalorder %s16, 1
      %s194 = scalar_select %p193, %s16, 1
      %s195 = smul.addr %s194, 5
      %s196 = smul.addr %s195, 4
      %s197 = scalar_lea.vmem %s0, %s196
      %p198 = pneg %p37
      %p199 = pneg %p34
      %p200 = pneg %p58
      %p201 = pneg %p55
      %p202 = pneg %p79
      %p203 = pneg %p76
      %p204 = pneg %p100
      %p205 = pneg %p97
      %p206 = pneg %p121
      %p207 = pneg %p118
      %p208 = pneg %p147
      %p209 = pneg %p144
      %p210 = scmp.lt.s32.totalorder %s16, 1
      %s211 = scalar_select %p210, %s16, 1
      %s212 = smul.addr %s211, 8
      %s213 = smul.addr %s212, 4
      %s214 = scalar_lea.vmem %s5, %s213
      %p215 = scmp.lt.s32.totalorder %s16, 1
      %s216 = scalar_select %p215, %s16, 1
      %s217 = smul.addr %s216, 5
      %s218 = smul.addr %s217, 4
      %s219 = scalar_lea.vmem %s0, %s218
      %p220 = scmp.lt.s32.totalorder %s16, 1
      %s221 = scalar_select %p220, %s16, 1
      %s222 = smul.addr %s221, 8
      %s223 = smul.addr %s222, 4
      %s224 = scalar_lea.vmem %s5, %s223
      %v225 = vld [vmem:[%s219] sm:$0xff]
      %v226 = vld [vmem:[%s219 + $0x8] sm:$0xff]
      %v227 = vld [vmem:[%s219 + $0x10] sm:$0xf]
      %v230 = vcombine.high %v225, %v225
      %v231 = vcombine.high %v226, %v226
      %v235 = vcombine.low %v225, %v225
      %v236 = vcombine.low %v226, %v226
      %v237 = vcombine.low %v227, %v227
      %238 = vrot.lane.b32.xlu0 %v235, 127
      %v239 = vpop.permute.xlu0 %238
      %240 = vrot.lane.b32.xlu0 %v225, 127
      %v241 = vpop.permute.xlu0 %240
      %242 = vrot.lane.b32.xlu0 %v236, 127
      %v243 = vpop.permute.xlu0 %242
      %244 = vrot.lane.b32.xlu0 %v226, 127
      %v245 = vpop.permute.xlu0 %244
      %246 = vrot.lane.b32.xlu0 %v237, 127
      %v247 = vpop.permute.xlu0 %246
      %vm248 = vcmask 1039360
      %v249 = vsel %vm248, %v239, %v241
      %v250 = vsel %vm248, %v241, %v243
      %v251 = vsel %vm248, %v243, %v245
      %v252 = vsel %vm248, %v245, %v247
      %257 = vrot.lane.b32.xlu0 %v225, 126
      %v258 = vpop.permute.xlu0 %257
      %259 = vrot.lane.b32.xlu0 %v230, 126
      %v260 = vpop.permute.xlu0 %259
      %261 = vrot.lane.b32.xlu0 %v226, 126
      %v262 = vpop.permute.xlu0 %261
      %263 = vrot.lane.b32.xlu0 %v231, 126
      %v264 = vpop.permute.xlu0 %263
      %265 = vrot.lane.b32.xlu0 %v227, 126
      %v266 = vpop.permute.xlu0 %265
      %vm267 = vcmask 1031168
      %v268 = vsel %vm267, %v258, %v260
      %v269 = vsel %vm267, %v260, %v262
      %v270 = vsel %vm267, %v262, %v264
      %v271 = vsel %vm267, %v264, %v266
      %276 = vrot.lane.b32.xlu0 %v235, 96
      %v277 = vpop.permute.xlu0 %276
      %278 = vrot.lane.b32.xlu0 %v225, 96
      %v279 = vpop.permute.xlu0 %278
      %280 = vrot.lane.b32.xlu0 %v236, 96
      %v281 = vpop.permute.xlu0 %280
      %282 = vrot.lane.b32.xlu0 %v226, 96
      %v283 = vpop.permute.xlu0 %282
      %284 = vrot.lane.b32.xlu0 %v237, 96
      %v285 = vpop.permute.xlu0 %284
      %vm286 = vcmask 785408
      %v287 = vsel %vm286, %v277, %v279
      %v288 = vsel %vm286, %v279, %v281
      %v289 = vsel %vm286, %v281, %v283
      %v290 = vsel %vm286, %v283, %v285
      %295 = vrot.lane.b32.xlu0 %v225, 95
      %v296 = vpop.permute.xlu0 %295
      %297 = vrot.lane.b32.xlu0 %v230, 95
      %v298 = vpop.permute.xlu0 %297
      %299 = vrot.lane.b32.xlu0 %v226, 95
      %v300 = vpop.permute.xlu0 %299
      %301 = vrot.lane.b32.xlu0 %v231, 95
      %v302 = vpop.permute.xlu0 %301
      %303 = vrot.lane.b32.xlu0 %v227, 95
      %v304 = vpop.permute.xlu0 %303
      %vm305 = vcmask 777216
      %v306 = vsel %vm305, %v296, %v298
      %v307 = vsel %vm305, %v298, %v300
      %v308 = vsel %vm305, %v300, %v302
      %v309 = vsel %vm305, %v302, %v304
      %314 = vrot.lane.b32.xlu0 %v235, 94
      %v315 = vpop.permute.xlu0 %314
      %316 = vrot.lane.b32.xlu0 %v225, 94
      %v317 = vpop.permute.xlu0 %316
      %318 = vrot.lane.b32.xlu0 %v236, 94
      %v319 = vpop.permute.xlu0 %318
      %320 = vrot.lane.b32.xlu0 %v226, 94
      %v321 = vpop.permute.xlu0 %320
      %322 = vrot.lane.b32.xlu0 %v237, 94
      %v323 = vpop.permute.xlu0 %322
      %vm324 = vcmask 769024
      %v325 = vsel %vm324, %v315, %v317
      %v326 = vsel %vm324, %v317, %v319
      %v327 = vsel %vm324, %v319, %v321
      %v328 = vsel %vm324, %v321, %v323
      %333 = vrot.lane.b32.xlu0 %v225, 64
      %v334 = vpop.permute.xlu0 %333
      %335 = vrot.lane.b32.xlu0 %v230, 64
      %v336 = vpop.permute.xlu0 %335
      %337 = vrot.lane.b32.xlu0 %v226, 64
      %v338 = vpop.permute.xlu0 %337
      %339 = vrot.lane.b32.xlu0 %v231, 64
      %v340 = vpop.permute.xlu0 %339
      %341 = vrot.lane.b32.xlu0 %v227, 64
      %v342 = vpop.permute.xlu0 %341
      %vm343 = vcmask 523264
      %v344 = vsel %vm343, %v334, %v336
      %v345 = vsel %vm343, %v336, %v338
      %v346 = vsel %vm343, %v338, %v340
      %v347 = vsel %vm343, %v340, %v342
      %352 = vrot.lane.b32.xlu0 %v235, 63
      %v353 = vpop.permute.xlu0 %352
      %354 = vrot.lane.b32.xlu0 %v225, 63
      %v355 = vpop.permute.xlu0 %354
      %356 = vrot.lane.b32.xlu0 %v236, 63
      %v357 = vpop.permute.xlu0 %356
      %358 = vrot.lane.b32.xlu0 %v226, 63
      %v359 = vpop.permute.xlu0 %358
      %360 = vrot.lane.b32.xlu0 %v237, 63
      %v361 = vpop.permute.xlu0 %360
      %vm362 = vcmask 515072
      %v363 = vsel %vm362, %v353, %v355
      %v364 = vsel %vm362, %v355, %v357
      %v365 = vsel %vm362, %v357, %v359
      %v366 = vsel %vm362, %v359, %v361
      %371 = vrot.lane.b32.xlu0 %v225, 62
      %v372 = vpop.permute.xlu0 %371
      %373 = vrot.lane.b32.xlu0 %v230, 62
      %v374 = vpop.permute.xlu0 %373
      %375 = vrot.lane.b32.xlu0 %v226, 62
      %v376 = vpop.permute.xlu0 %375
      %377 = vrot.lane.b32.xlu0 %v231, 62
      %v378 = vpop.permute.xlu0 %377
      %379 = vrot.lane.b32.xlu0 %v227, 62
      %v380 = vpop.permute.xlu0 %379
      %vm381 = vcmask 506880
      %v382 = vsel %vm381, %v372, %v374
      %v383 = vsel %vm381, %v374, %v376
      %v384 = vsel %vm381, %v376, %v378
      %v385 = vsel %vm381, %v378, %v380
      %vm386 = vcmask 1043456
      %v387 = vsel %vm386, %v225, %v249
      %v388 = vsel %vm386, %v230, %v250
      %v389 = vsel %vm386, %v226, %v251
      %v390 = vsel %vm386, %v231, %v252
      %v391 = vsel %vm386, %v268, %v287
      %v392 = vsel %vm386, %v269, %v288
      %v393 = vsel %vm386, %v270, %v289
      %v394 = vsel %vm386, %v271, %v290
      %v395 = vsel %vm386, %v306, %v325
      %v396 = vsel %vm386, %v307, %v326
      %v397 = vsel %vm386, %v308, %v327
      %v398 = vsel %vm386, %v309, %v328
      %v399 = vsel %vm386, %v344, %v363
      %v400 = vsel %vm386, %v345, %v364
      %v401 = vsel %vm386, %v346, %v365
      %v402 = vsel %vm386, %v347, %v366
      %v403 = vld [vmem:[%s1] sm:$0xf]
      %v404 = vld [vmem:[%s2] sm:$0xf]
      %406 = vset.pattern.permute.xlu0 0
      %407 = vperm.xlu0 %406, %v404
      %v408 = vpop.permute.xlu0 %407
      %vm410 = vcmask 293888
      %v412 = vsel %vm410, %v403, 0
      %v414 = vsel %vm386, %v382, 0
      %v416 = vsel %vm386, %v383, 0
      %v418 = vsel %vm386, %v384, 0
      %v420 = vsel %vm386, %v385, 0
      %422 = vmatprep.subr.mxu0 %v388
      %423 = vmatpush1.msra.mxu0 %v387
      %424 = vmatprep.subr.mxu0 %v392
      %425 = vmatpush1.msra.mxu0 %v391
      %426 = vmatprep.subr.mxu0 %v396
      %427 = vmatpush1.msra.mxu0 %v395
      %428 = vmatprep.subr.mxu0 %v400
      %429 = vmatpush1.msra.mxu0 %v399
      %430 = vmatprep.subr.mxu0 %v416
      %431 = vmatpush1.msra.mxu0 %v414
      %432 = vmatprep.subr.mxu0 0.0
      %433 = vmatpush1.msra.mxu0 0.0
      %434 = vmatprep.subr.mxu0 0.0
      %435 = vmatpush1.msra.mxu0 0.0
      %436 = vmatprep.subr.mxu0 0.0
      %437 = vmatpush1.msra.mxu0 0.0
      %438 = vmatprep.subr.mxu0 0.0
      %439 = vmatpush1.msra.mxu0 0.0
      %440 = vmatprep.subr.mxu0 0.0
      %441 = vmatpush1.msra.mxu0 0.0
      %442 = vmatprep.subr.mxu0 0.0
      %443 = vmatpush1.msra.mxu0 0.0
      %444 = vmatprep.subr.mxu0 0.0
      %445 = vmatpush1.msra.mxu0 0.0
      %446 = vmatprep.subr.mxu0 0.0
      %447 = vmatpush1.msra.mxu0 0.0
      %448 = vmatprep.subr.mxu0 0.0
      %449 = vmatpush1.msra.mxu0 0.0
      %450 = vmatprep.subr.mxu0 0.0
      %451 = vmatpush1.msra.mxu0 0.0
      %452 = vmatprep.subr.mxu0 0.0
      %453 = vmatpush1.msra.mxu0 0.0
      %454 = vmatprep.subr.mxu0 0.0
      %455 = vmatpush1.msra.mxu0 0.0
      %456 = vmatprep.subr.mxu0 0.0
      %457 = vmatpush1.msra.mxu0 0.0
      %458 = vmatprep.subr.mxu0 0.0
      %459 = vmatpush1.msra.mxu0 0.0
      %460 = vmatprep.subr.mxu0 0.0
      %461 = vmatpush1.msra.mxu0 0.0
      %462 = vmatprep.subr.mxu0 0.0
      %463 = vmatpush1.msra.mxu0 0.0
      %464 = vmatprep.subr.mxu0 0.0
      %465 = vmatpush1.msra.mxu0 0.0
      %466 = vmatprep.subr.mxu0 0.0
      %467 = vmatpush1.msra.mxu0 0.0
      %468 = vmatprep.subr.mxu0 0.0
      %469 = vmatpush1.msra.mxu0 0.0
      %470 = vmatprep.subr.mxu0 0.0
      %471 = vmatpush1.msra.mxu0 0.0
      %472 = vmatprep.subr.mxu0 0.0
      %473 = vmatpush1.msra.mxu0 0.0
      %474 = vmatprep.subr.mxu0 0.0
      %475 = vmatpush1.msra.mxu0 0.0
      %476 = vmatprep.subr.mxu0 0.0
      %477 = vmatpush1.msra.mxu0 0.0
      %478 = vmatprep.subr.mxu0 0.0
      %479 = vmatpush1.msra.mxu0 0.0
      %480 = vmatprep.subr.mxu0 0.0
      %481 = vmatpush1.msra.mxu0 0.0
      %482 = vmatprep.subr.mxu0 0.0
      %483 = vmatpush1.msra.mxu0 0.0
      %484 = vmatprep.subr.mxu0 0.0
      %485 = vmatpush1.msra.mxu0 0.0
      %486 = vmatprep.mubr.f32.mxu0 0.0
      %487 = vmatmul.mubr.f32.gmra.mrb[0].mxu0 %v412
      %v488 = vpop.f32.mrb[0].mxu0
      %v489 = vadd.f32 %v408, %v488
      %v490 = vpop.f32.mrb[0].mxu0
      %v491 = vadd.f32 %v408, %v490
      %492 = vdwg.mxu0
      %493 = vmatprep.subr.mxu0 %v390
      %494 = vmatpush1.msra.mxu0 %v389
      %495 = vmatprep.subr.mxu0 %v394
      %496 = vmatpush1.msra.mxu0 %v393
      %497 = vmatprep.subr.mxu0 %v398
      %498 = vmatpush1.msra.mxu0 %v397
      %499 = vmatprep.subr.mxu0 %v402
      %500 = vmatpush1.msra.mxu0 %v401
      %501 = vmatprep.subr.mxu0 %v420
      %502 = vmatpush1.msra.mxu0 %v418
      %503 = vmatprep.subr.mxu0 0.0
      %504 = vmatpush1.msra.mxu0 0.0
      %505 = vmatprep.subr.mxu0 0.0
      %506 = vmatpush1.msra.mxu0 0.0
      %507 = vmatprep.subr.mxu0 0.0
      %508 = vmatpush1.msra.mxu0 0.0
      %509 = vmatprep.subr.mxu0 0.0
      %510 = vmatpush1.msra.mxu0 0.0
      %511 = vmatprep.subr.mxu0 0.0
      %512 = vmatpush1.msra.mxu0 0.0
      %513 = vmatprep.subr.mxu0 0.0
      %514 = vmatpush1.msra.mxu0 0.0
      %515 = vmatprep.subr.mxu0 0.0
      %516 = vmatpush1.msra.mxu0 0.0
      %517 = vmatprep.subr.mxu0 0.0
      %518 = vmatpush1.msra.mxu0 0.0
      %519 = vmatprep.subr.mxu0 0.0
      %520 = vmatpush1.msra.mxu0 0.0
      %521 = vmatprep.subr.mxu0 0.0
      %522 = vmatpush1.msra.mxu0 0.0
      %523 = vmatprep.subr.mxu0 0.0
      %524 = vmatpush1.msra.mxu0 0.0
      %525 = vmatprep.subr.mxu0 0.0
      %526 = vmatpush1.msra.mxu0 0.0
      %527 = vmatprep.subr.mxu0 0.0
      %528 = vmatpush1.msra.mxu0 0.0
      %529 = vmatprep.subr.mxu0 0.0
      %530 = vmatpush1.msra.mxu0 0.0
      %531 = vmatprep.subr.mxu0 0.0
      %532 = vmatpush1.msra.mxu0 0.0
      %533 = vmatprep.subr.mxu0 0.0
      %534 = vmatpush1.msra.mxu0 0.0
      %535 = vmatprep.subr.mxu0 0.0
      %536 = vmatpush1.msra.mxu0 0.0
      %537 = vmatprep.subr.mxu0 0.0
      %538 = vmatpush1.msra.mxu0 0.0
      %539 = vmatprep.subr.mxu0 0.0
      %540 = vmatpush1.msra.mxu0 0.0
      %541 = vmatprep.subr.mxu0 0.0
      %542 = vmatpush1.msra.mxu0 0.0
      %543 = vmatprep.subr.mxu0 0.0
      %544 = vmatpush1.msra.mxu0 0.0
      %545 = vmatprep.subr.mxu0 0.0
      %546 = vmatpush1.msra.mxu0 0.0
      %547 = vmatprep.subr.mxu0 0.0
      %548 = vmatpush1.msra.mxu0 0.0
      %549 = vmatprep.subr.mxu0 0.0
      %550 = vmatpush1.msra.mxu0 0.0
      %551 = vmatprep.subr.mxu0 0.0
      %552 = vmatpush1.msra.mxu0 0.0
      %553 = vmatprep.subr.mxu0 0.0
      %554 = vmatpush1.msra.mxu0 0.0
      %555 = vmatprep.subr.mxu0 0.0
      %556 = vmatpush1.msra.mxu0 0.0
      %557 = vmatprep.mubr.f32.mxu0 0.0
      %558 = vmatmul.mubr.f32.gmra.mrb[0].mxu0 %v412
      %v559 = vpop.f32.mrb[0].mxu0
      %v560 = vadd.f32 %v408, %v559
      %v561 = vpop.f32.mrb[0].mxu0
      %v562 = vadd.f32 %v408, %v561
      %563 = vdwg.mxu0
      %v564 = vtanh.pop %v489
      %v565 = vtanh.pop %v491
      %v566 = vtanh.pop %v560
      %v567 = vtanh.pop %v562
      %v568 = vlaneseq
      %v569 = vand.u32 %v568, 127
      %v570 = vadd.s32 %v569, 128
      %v571 = vadd.s32 %v569, 256
      %v572 = vadd.s32 %v569, 384
      %v573 = vand.u32 %v569, 31
      %v574 = vand.u32 %v570, 31
      %v575 = vand.u32 %v571, 31
      %v576 = vand.u32 %v572, 31
      %vm577 = vcmp.lt.s32.totalorder %v573, 16
      %vm578 = vcmp.lt.s32.totalorder %v574, 16
      %vm579 = vcmp.lt.s32.totalorder %v575, 16
      %vm580 = vcmp.lt.s32.totalorder %v576, 16
      %v581 = vsel %vm577, 1, 0
      %v582 = vsel %vm578, 1, 0
      %v583 = vsel %vm579, 1, 0
      %v584 = vsel %vm580, 1, 0
      %vm585 = vcmp.eq.s32.totalorder %v581, 1
      %vm586 = vcmp.eq.s32.totalorder %v582, 1
      %vm587 = vcmp.eq.s32.totalorder %v583, 1
      %vm588 = vcmp.eq.s32.totalorder %v584, 1
      %v589 = vsel %vm585, %v564, 0.0
      %v590 = vsel %vm586, %v565, 0.0
      %v591 = vsel %vm587, %v566, 0.0
      %v592 = vsel %vm588, %v567, 0.0
      %597 = vrot.lane.b32.xlu0 %v589, 99
      %v598 = vpop.permute.xlu0 %597
      %599 = vrot.lane.b32.xlu0 %v590, 99
      %v600 = vpop.permute.xlu0 %599
      %601 = vrot.lane.b32.xlu0 %v591, 99
      %v602 = vpop.permute.xlu0 %601
      %603 = vrot.lane.b32.xlu0 %v592, 99
      %v604 = vpop.permute.xlu0 %603
      %vm605 = vcmask 809984
      %v606 = vsel %vm605, %v598, %v600
      %v607 = vsel %vm605, %v600, %v602
      %v608 = vsel %vm605, %v602, %v604
      %v614 = vsel %vm605, 0.0, %v598
      %v615 = vsel %vm605, %v604, 0.0
      %v619 = vrot.slane %v614, 4
      %v620 = vrot.slane %v606, 4
      %v621 = vrot.slane %v607, 4
      %v622 = vrot.slane %v608, 4
      %v623 = vrot.slane %v615, 4
      %v624 = vrot.slane 0.0, 4
      %625 = vrot.lane.b32.xlu0 %v619, 127
      %v626 = vpop.permute.xlu0 %625
      %627 = vrot.lane.b32.xlu0 %v620, 127
      %v628 = vpop.permute.xlu0 %627
      %629 = vrot.lane.b32.xlu0 %v621, 127
      %v630 = vpop.permute.xlu0 %629
      %631 = vrot.lane.b32.xlu0 %v622, 127
      %v632 = vpop.permute.xlu0 %631
      %633 = vrot.lane.b32.xlu0 %v623, 127
      %v634 = vpop.permute.xlu0 %633
      %635 = vrot.lane.b32.xlu0 %v624, 127
      %v636 = vpop.permute.xlu0 %635
      %v637 = vsel %vm248, %v626, %v628
      %v638 = vsel %vm248, %v628, %v630
      %v639 = vsel %vm248, %v630, %v632
      %v640 = vsel %vm248, %v632, %v634
      %v641 = vsel %vm248, %v634, %v636
      %648 = vrot.lane.b32.xlu0 %v614, 126
      %v649 = vpop.permute.xlu0 %648
      %650 = vrot.lane.b32.xlu0 %v606, 126
      %v651 = vpop.permute.xlu0 %650
      %652 = vrot.lane.b32.xlu0 %v607, 126
      %v653 = vpop.permute.xlu0 %652
      %654 = vrot.lane.b32.xlu0 %v608, 126
      %v655 = vpop.permute.xlu0 %654
      %656 = vrot.lane.b32.xlu0 %v615, 126
      %v657 = vpop.permute.xlu0 %656
      %658 = vrot.lane.b32.xlu0 0.0, 126
      %v659 = vpop.permute.xlu0 %658
      %v660 = vsel %vm267, %v649, %v651
      %v661 = vsel %vm267, %v651, %v653
      %v662 = vsel %vm267, %v653, %v655
      %v663 = vsel %vm267, %v655, %v657
      %v664 = vsel %vm267, %v657, %v659
      %671 = vrot.lane.b32.xlu0 %v619, 125
      %v672 = vpop.permute.xlu0 %671
      %673 = vrot.lane.b32.xlu0 %v620, 125
      %v674 = vpop.permute.xlu0 %673
      %675 = vrot.lane.b32.xlu0 %v621, 125
      %v676 = vpop.permute.xlu0 %675
      %677 = vrot.lane.b32.xlu0 %v622, 125
      %v678 = vpop.permute.xlu0 %677
      %679 = vrot.lane.b32.xlu0 %v623, 125
      %v680 = vpop.permute.xlu0 %679
      %681 = vrot.lane.b32.xlu0 %v624, 125
      %v682 = vpop.permute.xlu0 %681
      %vm683 = vcmask 1022976
      %v684 = vsel %vm683, %v672, %v674
      %v685 = vsel %vm683, %v674, %v676
      %v686 = vsel %vm683, %v676, %v678
      %v687 = vsel %vm683, %v678, %v680
      %v688 = vsel %vm683, %v680, %v682
      %695 = vrot.lane.b32.xlu0 %v614, 96
      %v696 = vpop.permute.xlu0 %695
      %697 = vrot.lane.b32.xlu0 %v606, 96
      %v698 = vpop.permute.xlu0 %697
      %699 = vrot.lane.b32.xlu0 %v607, 96
      %v700 = vpop.permute.xlu0 %699
      %701 = vrot.lane.b32.xlu0 %v608, 96
      %v702 = vpop.permute.xlu0 %701
      %703 = vrot.lane.b32.xlu0 %v615, 96
      %v704 = vpop.permute.xlu0 %703
      %705 = vrot.lane.b32.xlu0 0.0, 96
      %v706 = vpop.permute.xlu0 %705
      %v707 = vsel %vm286, %v696, %v698
      %v708 = vsel %vm286, %v698, %v700
      %v709 = vsel %vm286, %v700, %v702
      %v710 = vsel %vm286, %v702, %v704
      %v711 = vsel %vm286, %v704, %v706
      %718 = vrot.lane.b32.xlu0 %v619, 95
      %v719 = vpop.permute.xlu0 %718
      %720 = vrot.lane.b32.xlu0 %v620, 95
      %v721 = vpop.permute.xlu0 %720
      %722 = vrot.lane.b32.xlu0 %v621, 95
      %v723 = vpop.permute.xlu0 %722
      %724 = vrot.lane.b32.xlu0 %v622, 95
      %v725 = vpop.permute.xlu0 %724
      %726 = vrot.lane.b32.xlu0 %v623, 95
      %v727 = vpop.permute.xlu0 %726
      %728 = vrot.lane.b32.xlu0 %v624, 95
      %v729 = vpop.permute.xlu0 %728
      %v730 = vsel %vm305, %v719, %v721
      %v731 = vsel %vm305, %v721, %v723
      %v732 = vsel %vm305, %v723, %v725
      %v733 = vsel %vm305, %v725, %v727
      %v734 = vsel %vm305, %v727, %v729
      %741 = vrot.lane.b32.xlu0 %v614, 94
      %v742 = vpop.permute.xlu0 %741
      %743 = vrot.lane.b32.xlu0 %v606, 94
      %v744 = vpop.permute.xlu0 %743
      %745 = vrot.lane.b32.xlu0 %v607, 94
      %v746 = vpop.permute.xlu0 %745
      %747 = vrot.lane.b32.xlu0 %v608, 94
      %v748 = vpop.permute.xlu0 %747
      %749 = vrot.lane.b32.xlu0 %v615, 94
      %v750 = vpop.permute.xlu0 %749
      %751 = vrot.lane.b32.xlu0 0.0, 94
      %v752 = vpop.permute.xlu0 %751
      %v753 = vsel %vm324, %v742, %v744
      %v754 = vsel %vm324, %v744, %v746
      %v755 = vsel %vm324, %v746, %v748
      %v756 = vsel %vm324, %v748, %v750
      %v757 = vsel %vm324, %v750, %v752
      %764 = vrot.lane.b32.xlu0 %v619, 93
      %v765 = vpop.permute.xlu0 %764
      %766 = vrot.lane.b32.xlu0 %v620, 93
      %v767 = vpop.permute.xlu0 %766
      %768 = vrot.lane.b32.xlu0 %v621, 93
      %v769 = vpop.permute.xlu0 %768
      %770 = vrot.lane.b32.xlu0 %v622, 93
      %v771 = vpop.permute.xlu0 %770
      %772 = vrot.lane.b32.xlu0 %v623, 93
      %v773 = vpop.permute.xlu0 %772
      %774 = vrot.lane.b32.xlu0 %v624, 93
      %v775 = vpop.permute.xlu0 %774
      %vm776 = vcmask 760832
      %v777 = vsel %vm776, %v765, %v767
      %v778 = vsel %vm776, %v767, %v769
      %v779 = vsel %vm776, %v769, %v771
      %v780 = vsel %vm776, %v771, %v773
      %v781 = vsel %vm776, %v773, %v775
      %788 = vrot.lane.b32.xlu0 %v614, 64
      %v789 = vpop.permute.xlu0 %788
      %790 = vrot.lane.b32.xlu0 %v606, 64
      %v791 = vpop.permute.xlu0 %790
      %792 = vrot.lane.b32.xlu0 %v607, 64
      %v793 = vpop.permute.xlu0 %792
      %794 = vrot.lane.b32.xlu0 %v608, 64
      %v795 = vpop.permute.xlu0 %794
      %796 = vrot.lane.b32.xlu0 %v615, 64
      %v797 = vpop.permute.xlu0 %796
      %798 = vrot.lane.b32.xlu0 0.0, 64
      %v799 = vpop.permute.xlu0 %798
      %v800 = vsel %vm343, %v789, %v791
      %v801 = vsel %vm343, %v791, %v793
      %v802 = vsel %vm343, %v793, %v795
      %v803 = vsel %vm343, %v795, %v797
      %v804 = vsel %vm343, %v797, %v799
      %811 = vrot.lane.b32.xlu0 %v619, 63
      %v812 = vpop.permute.xlu0 %811
      %813 = vrot.lane.b32.xlu0 %v620, 63
      %v814 = vpop.permute.xlu0 %813
      %815 = vrot.lane.b32.xlu0 %v621, 63
      %v816 = vpop.permute.xlu0 %815
      %817 = vrot.lane.b32.xlu0 %v622, 63
      %v818 = vpop.permute.xlu0 %817
      %819 = vrot.lane.b32.xlu0 %v623, 63
      %v820 = vpop.permute.xlu0 %819
      %821 = vrot.lane.b32.xlu0 %v624, 63
      %v822 = vpop.permute.xlu0 %821
      %v823 = vsel %vm362, %v812, %v814
      %v824 = vsel %vm362, %v814, %v816
      %v825 = vsel %vm362, %v816, %v818
      %v826 = vsel %vm362, %v818, %v820
      %v827 = vsel %vm362, %v820, %v822
      %834 = vrot.lane.b32.xlu0 %v614, 62
      %v835 = vpop.permute.xlu0 %834
      %836 = vrot.lane.b32.xlu0 %v606, 62
      %v837 = vpop.permute.xlu0 %836
      %838 = vrot.lane.b32.xlu0 %v607, 62
      %v839 = vpop.permute.xlu0 %838
      %840 = vrot.lane.b32.xlu0 %v608, 62
      %v841 = vpop.permute.xlu0 %840
      %842 = vrot.lane.b32.xlu0 %v615, 62
      %v843 = vpop.permute.xlu0 %842
      %844 = vrot.lane.b32.xlu0 0.0, 62
      %v845 = vpop.permute.xlu0 %844
      %v846 = vsel %vm381, %v835, %v837
      %v847 = vsel %vm381, %v837, %v839
      %v848 = vsel %vm381, %v839, %v841
      %v849 = vsel %vm381, %v841, %v843
      %v850 = vsel %vm381, %v843, %v845
      %857 = vrot.lane.b32.xlu0 %v619, 61
      %v858 = vpop.permute.xlu0 %857
      %859 = vrot.lane.b32.xlu0 %v620, 61
      %v860 = vpop.permute.xlu0 %859
      %861 = vrot.lane.b32.xlu0 %v621, 61
      %v862 = vpop.permute.xlu0 %861
      %863 = vrot.lane.b32.xlu0 %v622, 61
      %v864 = vpop.permute.xlu0 %863
      %865 = vrot.lane.b32.xlu0 %v623, 61
      %v866 = vpop.permute.xlu0 %865
      %867 = vrot.lane.b32.xlu0 %v624, 61
      %v868 = vpop.permute.xlu0 %867
      %vm869 = vcmask 498688
      %v870 = vsel %vm869, %v858, %v860
      %v871 = vsel %vm869, %v860, %v862
      %v872 = vsel %vm869, %v862, %v864
      %v873 = vsel %vm869, %v864, %v866
      %v874 = vsel %vm869, %v866, %v868
      %881 = vrot.lane.b32.xlu0 %v614, 32
      %v882 = vpop.permute.xlu0 %881
      %883 = vrot.lane.b32.xlu0 %v606, 32
      %v884 = vpop.permute.xlu0 %883
      %885 = vrot.lane.b32.xlu0 %v607, 32
      %v886 = vpop.permute.xlu0 %885
      %887 = vrot.lane.b32.xlu0 %v608, 32
      %v888 = vpop.permute.xlu0 %887
      %889 = vrot.lane.b32.xlu0 %v615, 32
      %v890 = vpop.permute.xlu0 %889
      %891 = vrot.lane.b32.xlu0 0.0, 32
      %v892 = vpop.permute.xlu0 %891
      %vm893 = vcmask 261120
      %v894 = vsel %vm893, %v882, %v884
      %v895 = vsel %vm893, %v884, %v886
      %v896 = vsel %vm893, %v886, %v888
      %v897 = vsel %vm893, %v888, %v890
      %v898 = vsel %vm893, %v890, %v892
      %905 = vrot.lane.b32.xlu0 %v619, 31
      %v906 = vpop.permute.xlu0 %905
      %907 = vrot.lane.b32.xlu0 %v620, 31
      %v908 = vpop.permute.xlu0 %907
      %909 = vrot.lane.b32.xlu0 %v621, 31
      %v910 = vpop.permute.xlu0 %909
      %911 = vrot.lane.b32.xlu0 %v622, 31
      %v912 = vpop.permute.xlu0 %911
      %913 = vrot.lane.b32.xlu0 %v623, 31
      %v914 = vpop.permute.xlu0 %913
      %915 = vrot.lane.b32.xlu0 %v624, 31
      %v916 = vpop.permute.xlu0 %915
      %vm917 = vcmask 252928
      %v918 = vsel %vm917, %v906, %v908
      %v919 = vsel %vm917, %v908, %v910
      %v920 = vsel %vm917, %v910, %v912
      %v921 = vsel %vm917, %v912, %v914
      %v922 = vsel %vm917, %v914, %v916
      %929 = vrot.lane.b32.xlu0 %v614, 30
      %v930 = vpop.permute.xlu0 %929
      %931 = vrot.lane.b32.xlu0 %v606, 30
      %v932 = vpop.permute.xlu0 %931
      %933 = vrot.lane.b32.xlu0 %v607, 30
      %v934 = vpop.permute.xlu0 %933
      %935 = vrot.lane.b32.xlu0 %v608, 30
      %v936 = vpop.permute.xlu0 %935
      %937 = vrot.lane.b32.xlu0 %v615, 30
      %v938 = vpop.permute.xlu0 %937
      %939 = vrot.lane.b32.xlu0 0.0, 30
      %v940 = vpop.permute.xlu0 %939
      %vm941 = vcmask 244736
      %v942 = vsel %vm941, %v930, %v932
      %v943 = vsel %vm941, %v932, %v934
      %v944 = vsel %vm941, %v934, %v936
      %v945 = vsel %vm941, %v936, %v938
      %v946 = vsel %vm941, %v938, %v940
      %953 = vrot.lane.b32.xlu0 %v619, 29
      %v954 = vpop.permute.xlu0 %953
      %955 = vrot.lane.b32.xlu0 %v620, 29
      %v956 = vpop.permute.xlu0 %955
      %957 = vrot.lane.b32.xlu0 %v621, 29
      %v958 = vpop.permute.xlu0 %957
      %959 = vrot.lane.b32.xlu0 %v622, 29
      %v960 = vpop.permute.xlu0 %959
      %961 = vrot.lane.b32.xlu0 %v623, 29
      %v962 = vpop.permute.xlu0 %961
      %963 = vrot.lane.b32.xlu0 %v624, 29
      %v964 = vpop.permute.xlu0 %963
      %vm965 = vcmask 236544
      %v966 = vsel %vm965, %v954, %v956
      %v967 = vsel %vm965, %v956, %v958
      %v968 = vsel %vm965, %v958, %v960
      %v969 = vsel %vm965, %v960, %v962
      %v970 = vsel %vm965, %v962, %v964
      %v977 = vsel %vm386, %v614, %v637
      %v978 = vsel %vm386, %v606, %v638
      %v979 = vsel %vm386, %v607, %v639
      %v980 = vsel %vm386, %v608, %v640
      %v981 = vsel %vm386, %v615, %v641
      %v982 = vsel %vm386, 0.0, %v636
      %v983 = vsel %vm386, %v660, %v684
      %v984 = vsel %vm386, %v661, %v685
      %v985 = vsel %vm386, %v662, %v686
      %v986 = vsel %vm386, %v663, %v687
      %v987 = vsel %vm386, %v664, %v688
      %v988 = vsel %vm386, %v659, %v682
      %v989 = vsel %vm386, %v707, %v730
      %v990 = vsel %vm386, %v708, %v731
      %v991 = vsel %vm386, %v709, %v732
      %v992 = vsel %vm386, %v710, %v733
      %v993 = vsel %vm386, %v711, %v734
      %v994 = vsel %vm386, %v706, %v729
      %v995 = vsel %vm386, %v753, %v777
      %v996 = vsel %vm386, %v754, %v778
      %v997 = vsel %vm386, %v755, %v779
      %v998 = vsel %vm386, %v756, %v780
      %v999 = vsel %vm386, %v757, %v781
      %v1000 = vsel %vm386, %v752, %v775
      %v1001 = vsel %vm386, %v800, %v823
      %v1002 = vsel %vm386, %v801, %v824
      %v1003 = vsel %vm386, %v802, %v825
      %v1004 = vsel %vm386, %v803, %v826
      %v1005 = vsel %vm386, %v804, %v827
      %v1006 = vsel %vm386, %v799, %v822
      %v1007 = vsel %vm386, %v846, %v870
      %v1008 = vsel %vm386, %v847, %v871
      %v1009 = vsel %vm386, %v848, %v872
      %v1010 = vsel %vm386, %v849, %v873
      %v1011 = vsel %vm386, %v850, %v874
      %v1012 = vsel %vm386, %v845, %v868
      %v1013 = vsel %vm386, %v894, %v918
      %v1014 = vsel %vm386, %v895, %v919
      %v1015 = vsel %vm386, %v896, %v920
      %v1016 = vsel %vm386, %v897, %v921
      %v1017 = vsel %vm386, %v898, %v922
      %v1018 = vsel %vm386, %v892, %v916
      %v1019 = vsel %vm386, %v942, %v966
      %v1020 = vsel %vm386, %v943, %v967
      %v1021 = vsel %vm386, %v944, %v968
      %v1022 = vsel %vm386, %v945, %v969
      %v1023 = vsel %vm386, %v946, %v970
      %v1024 = vsel %vm386, %v940, %v964
      %v1025 = vld [vmem:[%s3] sm:$0xf]
      %v1026 = vld [vmem:[%s4] sm:$0xf]
      %1028 = vset.pattern.permute.xlu0 0
      %1029 = vperm.xlu0 %1028, %v1026
      %v1030 = vpop.permute.xlu0 %1029
      %v1033 = vsel %vm343, %v1025, 0
      %1035 = vmatprep.subr.mxu0 %v978
      %1036 = vmatpush1.msra.mxu0 %v977
      %1037 = vmatprep.subr.mxu0 %v984
      %1038 = vmatpush1.msra.mxu0 %v983
      %1039 = vmatprep.subr.mxu0 %v990
      %1040 = vmatpush1.msra.mxu0 %v989
      %1041 = vmatprep.subr.mxu0 %v996
      %1042 = vmatpush1.msra.mxu0 %v995
      %1043 = vmatprep.subr.mxu0 %v1002
      %1044 = vmatpush1.msra.mxu0 %v1001
      %1045 = vmatprep.subr.mxu0 %v1008
      %1046 = vmatpush1.msra.mxu0 %v1007
      %1047 = vmatprep.subr.mxu0 %v1014
      %1048 = vmatpush1.msra.mxu0 %v1013
      %1049 = vmatprep.subr.mxu0 %v1020
      %1050 = vmatpush1.msra.mxu0 %v1019
      %1051 = vmatprep.subr.mxu0 0.0
      %1052 = vmatpush1.msra.mxu0 0.0
      %1053 = vmatprep.subr.mxu0 0.0
      %1054 = vmatpush1.msra.mxu0 0.0
      %1055 = vmatprep.subr.mxu0 0.0
      %1056 = vmatpush1.msra.mxu0 0.0
      %1057 = vmatprep.subr.mxu0 0.0
      %1058 = vmatpush1.msra.mxu0 0.0
      %1059 = vmatprep.subr.mxu0 0.0
      %1060 = vmatpush1.msra.mxu0 0.0
      %1061 = vmatprep.subr.mxu0 0.0
      %1062 = vmatpush1.msra.mxu0 0.0
      %1063 = vmatprep.subr.mxu0 0.0
      %1064 = vmatpush1.msra.mxu0 0.0
      %1065 = vmatprep.subr.mxu0 0.0
      %1066 = vmatpush1.msra.mxu0 0.0
      %1067 = vmatprep.subr.mxu0 0.0
      %1068 = vmatpush1.msra.mxu0 0.0
      %1069 = vmatprep.subr.mxu0 0.0
      %1070 = vmatpush1.msra.mxu0 0.0
      %1071 = vmatprep.subr.mxu0 0.0
      %1072 = vmatpush1.msra.mxu0 0.0
      %1073 = vmatprep.subr.mxu0 0.0
      %1074 = vmatpush1.msra.mxu0 0.0
      %1075 = vmatprep.subr.mxu0 0.0
      %1076 = vmatpush1.msra.mxu0 0.0
      %1077 = vmatprep.subr.mxu0 0.0
      %1078 = vmatpush1.msra.mxu0 0.0
      %1079 = vmatprep.subr.mxu0 0.0
      %1080 = vmatpush1.msra.mxu0 0.0
      %1081 = vmatprep.subr.mxu0 0.0
      %1082 = vmatpush1.msra.mxu0 0.0
      %1083 = vmatprep.subr.mxu0 0.0
      %1084 = vmatpush1.msra.mxu0 0.0
      %1085 = vmatprep.subr.mxu0 0.0
      %1086 = vmatpush1.msra.mxu0 0.0
      %1087 = vmatprep.subr.mxu0 0.0
      %1088 = vmatpush1.msra.mxu0 0.0
      %1089 = vmatprep.subr.mxu0 0.0
      %1090 = vmatpush1.msra.mxu0 0.0
      %1091 = vmatprep.subr.mxu0 0.0
      %1092 = vmatpush1.msra.mxu0 0.0
      %1093 = vmatprep.subr.mxu0 0.0
      %1094 = vmatpush1.msra.mxu0 0.0
      %1095 = vmatprep.subr.mxu0 0.0
      %1096 = vmatpush1.msra.mxu0 0.0
      %1097 = vmatprep.subr.mxu0 0.0
      %1098 = vmatpush1.msra.mxu0 0.0
      %1099 = vmatprep.mubr.f32.mxu0 0.0
      %1100 = vmatmul.mubr.f32.gmra.mrb[0].mxu0 %v1033
      %v1101 = vpop.f32.mrb[0].mxu0
      %v1102 = vadd.f32 %v1030, %v1101
      %v1103 = vpop.f32.mrb[0].mxu0
      %v1104 = vadd.f32 %v1030, %v1103
      %1105 = vdwg.mxu0
      %1106 = vmatprep.subr.mxu0 %v980
      %1107 = vmatpush1.msra.mxu0 %v979
      %1108 = vmatprep.subr.mxu0 %v986
      %1109 = vmatpush1.msra.mxu0 %v985
      %1110 = vmatprep.subr.mxu0 %v992
      %1111 = vmatpush1.msra.mxu0 %v991
      %1112 = vmatprep.subr.mxu0 %v998
      %1113 = vmatpush1.msra.mxu0 %v997
      %1114 = vmatprep.subr.mxu0 %v1004
      %1115 = vmatpush1.msra.mxu0 %v1003
      %1116 = vmatprep.subr.mxu0 %v1010
      %1117 = vmatpush1.msra.mxu0 %v1009
      %1118 = vmatprep.subr.mxu0 %v1016
      %1119 = vmatpush1.msra.mxu0 %v1015
      %1120 = vmatprep.subr.mxu0 %v1022
      %1121 = vmatpush1.msra.mxu0 %v1021
      %1122 = vmatprep.subr.mxu0 0.0
      %1123 = vmatpush1.msra.mxu0 0.0
      %1124 = vmatprep.subr.mxu0 0.0
      %1125 = vmatpush1.msra.mxu0 0.0
      %1126 = vmatprep.subr.mxu0 0.0
      %1127 = vmatpush1.msra.mxu0 0.0
      %1128 = vmatprep.subr.mxu0 0.0
      %1129 = vmatpush1.msra.mxu0 0.0
      %1130 = vmatprep.subr.mxu0 0.0
      %1131 = vmatpush1.msra.mxu0 0.0
      %1132 = vmatprep.subr.mxu0 0.0
      %1133 = vmatpush1.msra.mxu0 0.0
      %1134 = vmatprep.subr.mxu0 0.0
      %1135 = vmatpush1.msra.mxu0 0.0
      %1136 = vmatprep.subr.mxu0 0.0
      %1137 = vmatpush1.msra.mxu0 0.0
      %1138 = vmatprep.subr.mxu0 0.0
      %1139 = vmatpush1.msra.mxu0 0.0
      %1140 = vmatprep.subr.mxu0 0.0
      %1141 = vmatpush1.msra.mxu0 0.0
      %1142 = vmatprep.subr.mxu0 0.0
      %1143 = vmatpush1.msra.mxu0 0.0
      %1144 = vmatprep.subr.mxu0 0.0
      %1145 = vmatpush1.msra.mxu0 0.0
      %1146 = vmatprep.subr.mxu0 0.0
      %1147 = vmatpush1.msra.mxu0 0.0
      %1148 = vmatprep.subr.mxu0 0.0
      %1149 = vmatpush1.msra.mxu0 0.0
      %1150 = vmatprep.subr.mxu0 0.0
      %1151 = vmatpush1.msra.mxu0 0.0
      %1152 = vmatprep.subr.mxu0 0.0
      %1153 = vmatpush1.msra.mxu0 0.0
      %1154 = vmatprep.subr.mxu0 0.0
      %1155 = vmatpush1.msra.mxu0 0.0
      %1156 = vmatprep.subr.mxu0 0.0
      %1157 = vmatpush1.msra.mxu0 0.0
      %1158 = vmatprep.subr.mxu0 0.0
      %1159 = vmatpush1.msra.mxu0 0.0
      %1160 = vmatprep.subr.mxu0 0.0
      %1161 = vmatpush1.msra.mxu0 0.0
      %1162 = vmatprep.subr.mxu0 0.0
      %1163 = vmatpush1.msra.mxu0 0.0
      %1164 = vmatprep.subr.mxu0 0.0
      %1165 = vmatpush1.msra.mxu0 0.0
      %1166 = vmatprep.subr.mxu0 0.0
      %1167 = vmatpush1.msra.mxu0 0.0
      %1168 = vmatprep.subr.mxu0 0.0
      %1169 = vmatpush1.msra.mxu0 0.0
      %1170 = vmatprep.mubr.f32.mxu0 0.0
      %1171 = vmatmul.mubr.f32.gmra.mrb[0].mxu0 %v1033
      %v1172 = vpop.f32.mrb[0].mxu0
      %v1173 = vadd.f32 %v1030, %v1172
      %v1174 = vpop.f32.mrb[0].mxu0
      %v1175 = vadd.f32 %v1030, %v1174
      %1176 = vdwg.mxu0
      %1177 = vmatprep.subr.mxu0 %v982
      %1178 = vmatpush1.msra.mxu0 %v981
      %1179 = vmatprep.subr.mxu0 %v988
      %1180 = vmatpush1.msra.mxu0 %v987
      %1181 = vmatprep.subr.mxu0 %v994
      %1182 = vmatpush1.msra.mxu0 %v993
      %1183 = vmatprep.subr.mxu0 %v1000
      %1184 = vmatpush1.msra.mxu0 %v999
      %1185 = vmatprep.subr.mxu0 %v1006
      %1186 = vmatpush1.msra.mxu0 %v1005
      %1187 = vmatprep.subr.mxu0 %v1012
      %1188 = vmatpush1.msra.mxu0 %v1011
      %1189 = vmatprep.subr.mxu0 %v1018
      %1190 = vmatpush1.msra.mxu0 %v1017
      %1191 = vmatprep.subr.mxu0 %v1024
      %1192 = vmatpush1.msra.mxu0 %v1023
      %1193 = vmatprep.subr.mxu0 0.0
      %1194 = vmatpush1.msra.mxu0 0.0
      %1195 = vmatprep.subr.mxu0 0.0
      %1196 = vmatpush1.msra.mxu0 0.0
      %1197 = vmatprep.subr.mxu0 0.0
      %1198 = vmatpush1.msra.mxu0 0.0
      %1199 = vmatprep.subr.mxu0 0.0
      %1200 = vmatpush1.msra.mxu0 0.0
      %1201 = vmatprep.subr.mxu0 0.0
      %1202 = vmatpush1.msra.mxu0 0.0
      %1203 = vmatprep.subr.mxu0 0.0
      %1204 = vmatpush1.msra.mxu0 0.0
      %1205 = vmatprep.subr.mxu0 0.0
      %1206 = vmatpush1.msra.mxu0 0.0
      %1207 = vmatprep.subr.mxu0 0.0
      %1208 = vmatpush1.msra.mxu0 0.0
      %1209 = vmatprep.subr.mxu0 0.0
      %1210 = vmatpush1.msra.mxu0 0.0
      %1211 = vmatprep.subr.mxu0 0.0
      %1212 = vmatpush1.msra.mxu0 0.0
      %1213 = vmatprep.subr.mxu0 0.0
      %1214 = vmatpush1.msra.mxu0 0.0
      %1215 = vmatprep.subr.mxu0 0.0
      %1216 = vmatpush1.msra.mxu0 0.0
      %1217 = vmatprep.subr.mxu0 0.0
      %1218 = vmatpush1.msra.mxu0 0.0
      %1219 = vmatprep.subr.mxu0 0.0
      %1220 = vmatpush1.msra.mxu0 0.0
      %1221 = vmatprep.subr.mxu0 0.0
      %1222 = vmatpush1.msra.mxu0 0.0
      %1223 = vmatprep.subr.mxu0 0.0
      %1224 = vmatpush1.msra.mxu0 0.0
      %1225 = vmatprep.subr.mxu0 0.0
      %1226 = vmatpush1.msra.mxu0 0.0
      %1227 = vmatprep.subr.mxu0 0.0
      %1228 = vmatpush1.msra.mxu0 0.0
      %1229 = vmatprep.subr.mxu0 0.0
      %1230 = vmatpush1.msra.mxu0 0.0
      %1231 = vmatprep.subr.mxu0 0.0
      %1232 = vmatpush1.msra.mxu0 0.0
      %1233 = vmatprep.subr.mxu0 0.0
      %1234 = vmatpush1.msra.mxu0 0.0
      %1235 = vmatprep.subr.mxu0 0.0
      %1236 = vmatpush1.msra.mxu0 0.0
      %1237 = vmatprep.subr.mxu0 0.0
      %1238 = vmatpush1.msra.mxu0 0.0
      %1239 = vmatprep.subr.mxu0 0.0
      %1240 = vmatpush1.msra.mxu0 0.0
      %1241 = vmatprep.mubr.f32.mxu0 0.0
      %1242 = vmatmul.mubr.f32.gmra.mrb[0].mxu0 %v1033
      %v1243 = vpop.f32.mrb[0].mxu0
      %v1244 = vadd.f32 %v1030, %v1243
      %v1245 = vpop.f32.mrb[0].mxu0
      %v1246 = vadd.f32 %v1030, %v1245
      %1247 = vdwg.mxu0
      %1248 = vmatprep.subr.mxu0 %v982
      %1249 = vmatpush1.msra.mxu0 %v982
      %1250 = vmatprep.subr.mxu0 %v988
      %1251 = vmatpush1.msra.mxu0 %v988
      %1252 = vmatprep.subr.mxu0 %v994
      %1253 = vmatpush1.msra.mxu0 %v994
      %1254 = vmatprep.subr.mxu0 %v1000
      %1255 = vmatpush1.msra.mxu0 %v1000
      %1256 = vmatprep.subr.mxu0 %v1006
      %1257 = vmatpush1.msra.mxu0 %v1006
      %1258 = vmatprep.subr.mxu0 %v1012
      %1259 = vmatpush1.msra.mxu0 %v1012
      %1260 = vmatprep.subr.mxu0 %v1018
      %1261 = vmatpush1.msra.mxu0 %v1018
      %1262 = vmatprep.subr.mxu0 %v1024
      %1263 = vmatpush1.msra.mxu0 %v1024
      %1264 = vmatprep.subr.mxu0 0.0
      %1265 = vmatpush1.msra.mxu0 0.0
      %1266 = vmatprep.subr.mxu0 0.0
      %1267 = vmatpush1.msra.mxu0 0.0
      %1268 = vmatprep.subr.mxu0 0.0
      %1269 = vmatpush1.msra.mxu0 0.0
      %1270 = vmatprep.subr.mxu0 0.0
      %1271 = vmatpush1.msra.mxu0 0.0
      %1272 = vmatprep.subr.mxu0 0.0
      %1273 = vmatpush1.msra.mxu0 0.0
      %1274 = vmatprep.subr.mxu0 0.0
      %1275 = vmatpush1.msra.mxu0 0.0
      %1276 = vmatprep.subr.mxu0 0.0
      %1277 = vmatpush1.msra.mxu0 0.0
      %1278 = vmatprep.subr.mxu0 0.0
      %1279 = vmatpush1.msra.mxu0 0.0
      %1280 = vmatprep.subr.mxu0 0.0
      %1281 = vmatpush1.msra.mxu0 0.0
      %1282 = vmatprep.subr.mxu0 0.0
      %1283 = vmatpush1.msra.mxu0 0.0
      %1284 = vmatprep.subr.mxu0 0.0
      %1285 = vmatpush1.msra.mxu0 0.0
      %1286 = vmatprep.subr.mxu0 0.0
      %1287 = vmatpush1.msra.mxu0 0.0
      %1288 = vmatprep.subr.mxu0 0.0
      %1289 = vmatpush1.msra.mxu0 0.0
      %1290 = vmatprep.subr.mxu0 0.0
      %1291 = vmatpush1.msra.mxu0 0.0
      %1292 = vmatprep.subr.mxu0 0.0
      %1293 = vmatpush1.msra.mxu0 0.0
      %1294 = vmatprep.subr.mxu0 0.0
      %1295 = vmatpush1.msra.mxu0 0.0
      %1296 = vmatprep.subr.mxu0 0.0
      %1297 = vmatpush1.msra.mxu0 0.0
      %1298 = vmatprep.subr.mxu0 0.0
      %1299 = vmatpush1.msra.mxu0 0.0
      %1300 = vmatprep.subr.mxu0 0.0
      %1301 = vmatpush1.msra.mxu0 0.0
      %1302 = vmatprep.subr.mxu0 0.0
      %1303 = vmatpush1.msra.mxu0 0.0
      %1304 = vmatprep.subr.mxu0 0.0
      %1305 = vmatpush1.msra.mxu0 0.0
      %1306 = vmatprep.subr.mxu0 0.0
      %1307 = vmatpush1.msra.mxu0 0.0
      %1308 = vmatprep.subr.mxu0 0.0
      %1309 = vmatpush1.msra.mxu0 0.0
      %1310 = vmatprep.subr.mxu0 0.0
      %1311 = vmatpush1.msra.mxu0 0.0
      %1312 = vmatprep.mubr.f32.mxu0 0.0
      %1313 = vmatmul.mubr.f32.gmra.mrb[0].mxu0 %v1033
      %v1314 = vpop.f32.mrb[0].mxu0
      %v1315 = vadd.f32 %v1030, %v1314
      %v1316 = vpop.f32.mrb[0].mxu0
      %v1317 = vadd.f32 %v1030, %v1316
      %1318 = vdwg.mxu0
      %v1319 = vtanh.pop %v1102
      %v1320 = vtanh.pop %v1104
      %v1321 = vtanh.pop %v1173
      %v1322 = vtanh.pop %v1175
      %v1323 = vtanh.pop %v1244
      %v1324 = vtanh.pop %v1246
      %v1325 = vtanh.pop %v1315
      %v1326 = vtanh.pop %v1317
      %v1335 = vcombine.low %v1319, %v1320
      %v1336 = vcombine.low %v1321, %v1322
      %v1337 = vcombine.low %v1323, %v1324
      %v1338 = vcombine.low %v1325, %v1326
      %1343 = vst [vmem:[%s224] sm:$0xff] %v1335
      %1344 = vst [vmem:[%s224 + $0x8] sm:$0xff] %v1336
      %1345 = vst [vmem:[%s224 + $0x10] sm:$0xff] %v1337
      %1346 = vst [vmem:[%s224 + $0x18] sm:$0xff] %v1338
      %p1347 = scmp.lt.s32.totalorder %s16, 1
      %s1348 = scalar_select %p1347, %s16, 1
      %s1349 = smul.addr %s1348, 8
      %s1350 = smul.addr %s1349, 4
      %s1351 = scalar_lea.vmem %s5, %s1350
      // Predicated region
      $region41: #{model_forward.1} parent=39 // pred_check
        %p1352 = pneg %p144
      $region42: #{model_forward.1} parent=39 // pred_check_branch
        %1354 = sbr.rel (%p1352) target = $region44
      $region43: #{model_forward.1} parent=39 // pred_region
        _
      $region44: #{model_forward.1} parent=39 // pred_fallthru
        _
    $region40: #{model_forward.1} parent=5 // pred_fallthru
      _
    %p1355 = scmp.le.s32.totalorder 2, %s11
    // Predicated region
    $region45: #{model_forward.1} parent=5 // pred_check
      %p1356 = pneg %p1355
    $region46: #{model_forward.1} parent=5 // pred_check_branch
      %1358 = sbr.rel (%p1356) target = $region48
    $region47: #{model_forward.1} parent=5 // pred_region
      %s1359 = ssub.s32 %s11, 2
      // Predicated region
      $region49: #{model_forward.1} parent=47 // pred_check
        %p1360 = pneg %p150
      $region50: #{model_forward.1} parent=47 // pred_check_branch
        %1362 = sbr.rel (%p1360) target = $region52
      $region51: #{model_forward.1} parent=47 // pred_region
        %p1363 = scmp.lt.s32.totalorder %s17, 1
        %s1364 = scalar_select %p1363, %s17, 1
        %s1365 = smul.addr %s1364, 8
        %s1366 = smul.addr %s1365, 4
        %s1367 = scalar_lea.vmem %s5, %s1366
      $region52: #{model_forward.1} parent=47 // pred_fallthru
        _
    $region48: #{model_forward.1} parent=5 // pred_fallthru
      _
  $region6: #{model_forward.1} parent=0 // loop_footer
    %s15 = sadd.s32 1, %s11
  $region7: #{model_forward.1} parent=0 // loop_footer_branch
    %10 = sbr.rel target = $region3
  $region8: #{model_forward.1} parent=0 // loop_exit
    _

</llo_original>
